<compile_context>
chip_gen: v7x
topology: tpu7x:2x2x1
jax: 0.10.0
libtpu: 0.0.40
codegen_flags: <defaults>
</compile_context>

<pallas_src>
import functools

import jax
import jax.numpy as jnp
from jax.experimental import pallas as pl
from jax.experimental.pallas import tpu as pltpu


# ----------------------------------------------------------------------------
# Tiling / compiler-parameter helpers
# ----------------------------------------------------------------------------
def _pick_row_tile(n):
    """Sublane-axis tile: multiple of 8 (or the full dim), as large as sensible."""
    for c in (512, 256, 128, 64, 32, 16, 8):
        if n % c == 0:
            return c
    return n  # full (untiled) dimension is always legal


def _pick_col_tile(n):
    """Lane-axis tile: multiple of 128, else the full dimension."""
    for c in (512, 256, 128):
        if n % c == 0:
            return c
    return n


def _pick_feat_tile(d):
    for c in (512, 256, 128):
        if d % c == 0:
            return c
    return d


def _mosaic_params(dimension_semantics, stream_tile_bytes, resident_bytes):
    """CompilerParams with a VMEM limit derived from the chosen tiles.

    Sized for double-buffered input/output streams + resident weights/scratch,
    capped at 32 MiB so it stays inside v7x's 64 MiB physical VMEM (and the
    v6e/v7x scoped default) with headroom.
    """
    vmem = 2 * sum(stream_tile_bytes) + resident_bytes + (2 << 20)
    vmem = int(min(max(vmem, 4 << 20), 32 << 20))
    return pltpu.CompilerParams(dimension_semantics=dimension_semantics,
                                vmem_limit_bytes=vmem)


# ----------------------------------------------------------------------------
# Pallas kernels
# ----------------------------------------------------------------------------
def _epilogue(h, b, *, apply_act, activation, slope, normalize):
    """Bias + activation + optional row-L2 norm, all on the f32 accumulator."""
    h = h + b
    if apply_act:
        if activation == 'relu':
            h = jnp.maximum(h, 0.0)
        else:  # leaky relu
            h = jnp.where(h > 0.0, h, slope * h)
    if normalize:
        inv_norm = jax.lax.rsqrt(jnp.sum(h * h, axis=-1, keepdims=True) + 1e-12)
        h = h * inv_norm
    return h


def _gcn_agg_then_w_kernel(a_ref, x_ref, w_ref, b_ref, o_ref, acc_ref, *,
                           apply_act, activation, slope, normalize):
    """acc += A_blk @ X_blk over k;  on last k:  act(acc @ W + b)."""
    k = pl.program_id(2)

    @pl.when(k == 0)
    def _():
        acc_ref[...] = jnp.zeros_like(acc_ref)

    acc_ref[...] += jnp.dot(a_ref[0], x_ref[0],
                            preferred_element_type=jnp.float32)

    @pl.when(k == pl.num_programs(2) - 1)
    def _():
        ax = acc_ref[...].astype(w_ref.dtype)                  # bf16 for MXU
        h = jnp.dot(ax, w_ref[...], preferred_element_type=jnp.float32)
        h = _epilogue(h, b_ref[...], apply_act=apply_act,
                      activation=activation, slope=slope, normalize=normalize)
        o_ref[0] = h.astype(o_ref.dtype)


def _gcn_agg_kernel(a_ref, m_ref, b_ref, o_ref, acc_ref, *,
                    apply_act, activation, slope, normalize):
    """acc += A_blk @ M_blk over k (M = X @ W);  on last k:  act(acc + b)."""
    k = pl.program_id(2)

    @pl.when(k == 0)
    def _():
        acc_ref[...] = jnp.zeros_like(acc_ref)

    acc_ref[...] += jnp.dot(a_ref[0], m_ref[0],
                            preferred_element_type=jnp.float32)

    @pl.when(k == pl.num_programs(2) - 1)
    def _():
        h = _epilogue(acc_ref[...], b_ref[...], apply_act=apply_act,
                      activation=activation, slope=slope, normalize=normalize)
        o_ref[0] = h.astype(o_ref.dtype)


def _feature_transform_kernel(x_ref, w_ref, o_ref):
    """o = X_blk @ W  (bf16 MXU inputs, f32 accumulation)."""
    o_ref[0] = jnp.dot(x_ref[0], w_ref[...],
                       preferred_element_type=jnp.float32).astype(o_ref.dtype)


def _standardize_kernel(h_ref, z_ref, *, n_total, eps):
    """z = (h - mean_0(h)) / std_0(h), unbiased std (ddof=1), eps-guarded."""
    h = h_ref[0].astype(jnp.float32)                 # (N, tile_feat)
    n = float(n_total)
    denom = float(max(n_total - 1, 1))
    mean = jnp.sum(h, axis=0, keepdims=True) / n
    c = h - mean
    var = jnp.sum(c * c, axis=0, keepdims=True) / denom
    z_ref[0] = (c * jax.lax.rsqrt(var + eps)).astype(z_ref.dtype)


# ----------------------------------------------------------------------------
# Wrappers
# ----------------------------------------------------------------------------
def feature_transform(h_bf, w_bf):
    """M = H @ W for both views, tiled over rows. H: [V, N, d_in] bf16."""
    v, n, d_in = h_bf.shape
    d_out = w_bf.shape[1]
    tm = _pick_row_tile(n)
    return pl.pallas_call(
        _feature_transform_kernel,
        out_shape=jax.ShapeDtypeStruct((v, n, d_out), jnp.bfloat16),
        grid_spec=pltpu.PrefetchScalarGridSpec(
            num_scalar_prefetch=0,
            grid=(v, n // tm),
            in_specs=[pl.BlockSpec((1, tm, d_in), lambda v_, i: (v_, i, 0)),
                      pl.BlockSpec((d_in, d_out), lambda v_, i: (0, 0))],
            out_specs=pl.BlockSpec((1, tm, d_out), lambda v_, i: (v_, i, 0))),
        compiler_params=_mosaic_params(
            ("parallel", "parallel"),
            (tm * d_in * 2, tm * d_out * 2),
            d_in * d_out * 2),
        cost_estimate=pl.CostEstimate(
            flops=2 * v * n * d_in * d_out, transcendentals=0,
            bytes_accessed=v * n * (d_in + d_out) * 2 + d_in * d_out * 2),
    )(h_bf, w_bf)


def gcn_layer(a_bf, h, w, b, *, apply_act, activation, slope, normalize,
              out_dtype):
    """One GCN layer on both stacked views: act(A_hat @ h @ W + b)."""
    v, n, d_in = h.shape
    d_out = w.shape[1]
    w_bf = w.astype(jnp.bfloat16)
    h_bf = h.astype(jnp.bfloat16)

    tm = _pick_row_tile(n)        # rows of A / output rows
    tk = _pick_col_tile(n)        # contraction (columns of A)
    grid_rows, grid_k = n // tm, n // tk
    out_itemsize = jnp.dtype(out_dtype).itemsize

    if d_in <= d_out:
        # Re-association: (A @ X) @ W  -> the N^2 matmul contracts d_in.
        kernel = functools.partial(
            _gcn_agg_then_w_kernel, apply_act=apply_act,
            activation=activation, slope=slope, normalize=normalize)
        in_arrays = (a_bf, h_bf, w_bf, b)
        in_specs = [
            pl.BlockSpec((1, tm, tk), lambda v_, i, k: (v_, i, k)),
            pl.BlockSpec((1, tk, d_in), lambda v_, i, k: (v_, k, 0)),
            pl.BlockSpec((d_in, d_out), lambda v_, i, k: (0, 0)),
            pl.BlockSpec((1, d_out), lambda v_, i, k: (0, 0)),
        ]
        acc_cols = d_in
        flops = 2 * v * n * n * d_in + 2 * v * n * d_in * d_out
    else:
        # Re-association: A @ (X @ W) with the small X@W done once, not per tile.
        m = feature_transform(h_bf, w_bf)
        kernel = functools.partial(
            _gcn_agg_kernel, apply_act=apply_act,
            activation=activation, slope=slope, normalize=normalize)
        in_arrays = (a_bf, m, b)
        in_specs = [
            pl.BlockSpec((1, tm, tk), lambda v_, i, k: (v_, i, k)),
            pl.BlockSpec((1, tk, d_out), lambda v_, i, k: (v_, k, 0)),
            pl.BlockSpec((1, d_out), lambda v_, i, k: (0, 0)),
        ]
        acc_cols = d_out
        flops = 2 * v * n * n * d_out

    stream_tiles = (tm * tk * 2,                    # A tile (bf16)
                    tk * acc_cols * 2,              # X / M tile (bf16)
                    tm * d_out * out_itemsize)      # output tile
    resident = tm * acc_cols * 4 + d_in * d_out * 2 + d_out * 4
    cost = pl.CostEstimate(
        flops=flops,
        transcendentals=v * n if normalize else 0,
        bytes_accessed=(v * n * n * 2                       # A_hat (dominant)
                        + v * n * acc_cols * 2 * grid_rows  # X/M re-reads
                        + v * n * d_out * out_itemsize))

    return pl.pallas_call(
        kernel,
        out_shape=jax.ShapeDtypeStruct((v, n, d_out), out_dtype),
        grid_spec=pltpu.PrefetchScalarGridSpec(
            num_scalar_prefetch=0,
            grid=(v, grid_rows, grid_k),
            in_specs=in_specs,
            out_specs=pl.BlockSpec((1, tm, d_out), lambda v_, i, k: (v_, i, 0)),
            scratch_shapes=[pltpu.VMEM((tm, acc_cols), jnp.float32)]),
        compiler_params=_mosaic_params(
            ("parallel", "parallel", "arbitrary"), stream_tiles, resident),
        cost_estimate=cost,
    )(*in_arrays)


def standardize(h, *, eps=1e-12):
    """Column-standardize both views. h: [V, N, D] -> z: [V, N, D] f32."""
    # TODO(synk): for very large N (N*tile_feat*4 B exceeding VMEM) switch to a
    # two-phase row-streamed variant (sum/sumsq scratch pass, then apply pass).
    v, n, d = h.shape
    tf = _pick_feat_tile(d)
    kernel = functools.partial(_standardize_kernel, n_total=n, eps=eps)
    return pl.pallas_call(
        kernel,
        out_shape=jax.ShapeDtypeStruct((v, n, d), jnp.float32),
        grid_spec=pltpu.PrefetchScalarGridSpec(
            num_scalar_prefetch=0,
            grid=(v, d // tf),
            in_specs=[pl.BlockSpec((1, n, tf), lambda v_, j: (v_, 0, j))],
            out_specs=pl.BlockSpec((1, n, tf), lambda v_, j: (v_, 0, j))),
        compiler_params=_mosaic_params(
            ("parallel", "parallel"),
            (n * tf * jnp.dtype(h.dtype).itemsize, n * tf * 4),
            0),
        cost_estimate=pl.CostEstimate(
            flops=6 * v * n * d, transcendentals=v * d,
            bytes_accessed=v * n * d * (jnp.dtype(h.dtype).itemsize + 4)),
    )(h)


def gcn_backbone(a_hat, x, weights, biases, *,
                 activation='relu', slope=0.1, normalize=True):
    """a_hat: [V, N, N], x: [V, N, d_in]; returns [V, N, d_out] f32."""
    n_layers = len(weights)
    a_bf = a_hat.astype(jnp.bfloat16)   # bf16 A_hat: half the dominant N^2 stream
    h = x
    for i, (w, b) in enumerate(zip(weights, biases)):
        is_hidden = i < n_layers - 1
        h = gcn_layer(a_bf, h, w, b,
                      apply_act=is_hidden,
                      activation=activation,
                      slope=slope,
                      normalize=normalize and is_hidden,
                      out_dtype=jnp.bfloat16 if is_hidden else jnp.float32)
    return h


def cca_ssg_forward(x1, a_hat1, x2, a_hat2, weights, biases, *,
                    activation='relu', slope=0.1, normalize=True):
    x = jnp.stack([x1, x2], axis=0)
    a_hat = jnp.stack([a_hat1, a_hat2], axis=0)
    h = gcn_backbone(a_hat, x, weights, biases,
                     activation=activation, slope=slope, normalize=normalize)
    z = standardize(h)
    return z[0], z[1]


# ----------------------------------------------------------------------------
# Deterministic parameter / graph construction
# ----------------------------------------------------------------------------
def make_params(key, input_dim, hidden_dim, output_dim, n_layers):
    dims = [input_dim] + [hidden_dim] * (n_layers - 1) + [output_dim]
    weights, biases = [], []
    for i in range(n_layers):
        key, wk = jax.random.split(key)
        fan_in, fan_out = dims[i], dims[i + 1]
        scale = (2.0 / (fan_in + fan_out)) ** 0.5  # glorot
        w = scale * jax.random.normal(wk, (fan_in, fan_out), dtype=jnp.float32)
        b = jnp.zeros((1, fan_out), dtype=jnp.float32)
        weights.append(w)
        biases.append(b)
    return weights, biases


def normalized_adjacency(edge_index, num_nodes):
    """Dense D^{-1/2}(A + I)D^{-1/2} from a [2, E] edge_index."""
    a = jnp.zeros((num_nodes, num_nodes), dtype=jnp.float32)
    a = a.at[edge_index[0], edge_index[1]].set(1.0)
    a = a.at[edge_index[1], edge_index[0]].set(1.0)   # symmetrize
    a = a + jnp.eye(num_nodes, dtype=jnp.float32)      # self loops
    deg = jnp.sum(a, axis=1)
    d_inv_sqrt = 1.0 / jnp.sqrt(deg)
    return a * d_inv_sqrt[:, None] * d_inv_sqrt[None, :]


# ----------------------------------------------------------------------------
# Main
# ----------------------------------------------------------------------------
if __name__ == "__main__":
    key = jax.random.PRNGKey(0)

    num_nodes = 16
    input_dim = 32
    hidden_dim = 64
    output_dim = 32
    n_layers = 2

    # Deterministic ring graph (plus a few chords) for both views.
    src = jnp.arange(num_nodes, dtype=jnp.int32)
    dst = (src + 1) % num_nodes
    chords_src = jnp.arange(0, num_nodes, 4, dtype=jnp.int32)
    chords_dst = (chords_src + num_nodes // 2) % num_nodes
    edge_index = jnp.stack([jnp.concatenate([src, chords_src]),
                            jnp.concatenate([dst, chords_dst])], axis=0)
    a_hat = normalized_adjacency(edge_index, num_nodes)

    # Two augmented feature views (data1.x, data2.x).
    key, k1, k2, kp = jax.random.split(key, 4)
    x1 = jax.random.normal(k1, (num_nodes, input_dim), dtype=jnp.float32)
    x2 = jax.random.normal(k2, (num_nodes, input_dim), dtype=jnp.float32)

    weights, biases = make_params(kp, input_dim, hidden_dim, output_dim, n_layers)

    z1, z2 = cca_ssg_forward(x1, a_hat, x2, a_hat, weights, biases,
                             activation='relu', slope=0.1, normalize=True)
    jax.block_until_ready((z1, z2))

    assert z1.shape == (num_nodes, output_dim)
    assert z2.shape == (num_nodes, output_dim)
    assert bool(jnp.all(jnp.isfinite(z1))) and bool(jnp.all(jnp.isfinite(z2)))

    print("KERNEL_OK")
</pallas_src>

<mosaic_0001>
module attributes {stable_mosaic.version = 11 : i64} {
  func.func @_gcn_agg_then_w_kernel(%arg0: i32, %arg1: i32, %arg2: i32, %arg3: memref<1x16x16xbf16, #tpu.memory_space<vmem>>, %arg4: memref<1x16x32xbf16, #tpu.memory_space<vmem>>, %arg5: memref<32x64xbf16, #tpu.memory_space<vmem>>, %arg6: memref<1x64xf32, #tpu.memory_space<vmem>>, %arg7: memref<1x16x64xbf16, #tpu.memory_space<vmem>>, %arg8: memref<16x32xf32, #tpu.memory_space<vmem>>) attributes {dimension_semantics = [#tpu.dimension_semantics<parallel>, #tpu.dimension_semantics<parallel>, #tpu.dimension_semantics<arbitrary>], iteration_bounds = array<i64: 2, 1, 1>, scalar_prefetch = 0 : i64, scratch_operands = 1 : i64, tpu.core_type = #tpu.core_type<tc>, window_params = [{transform_indices = @transform_0, window_bounds = array<i64: 1, 16, 16>}, {transform_indices = @transform_1, window_bounds = array<i64: 1, 16, 32>}, {pipeline_mode = #tpu.pipeline_mode<synchronous>, transform_indices = @transform_2, window_bounds = array<i64: 32, 64>}, {pipeline_mode = #tpu.pipeline_mode<synchronous>, transform_indices = @transform_3, window_bounds = array<i64: 1, 64>}, {transform_indices = @transform_4, window_bounds = array<i64: 1, 16, 64>}]} {
    %c0_i32 = arith.constant 0 : i32
    %0 = arith.cmpi eq, %arg2, %c0_i32 : i32
    %1 = arith.extui %0 : i1 to i32
    %c0_i32_0 = arith.constant 0 : i32
    %2 = arith.cmpi ne, %1, %c0_i32_0 : i32
    scf.if %2 {
      %cst_12 = arith.constant 0.000000e+00 : f32
      %14 = vector.broadcast %cst_12 : f32 to vector<16x32xf32>
      %c0_13 = arith.constant 0 : index
      %c0_14 = arith.constant 0 : index
      %15 = vector.load %arg8[%c0_13, %c0_14] : memref<16x32xf32, #tpu.memory_space<vmem>>, vector<16x32xf32>
      tpu.vector_store %arg8[%c0_13, %c0_14], %14 {strides = array<i32>} : memref<16x32xf32, #tpu.memory_space<vmem>>, vector<16x32xf32>,
    } else {
    }
    %c0 = arith.constant 0 : index
    %c0_1 = arith.constant 0 : index
    %3 = vector.load %arg8[%c0, %c0_1] : memref<16x32xf32, #tpu.memory_space<vmem>>, vector<16x32xf32>
    %c0_2 = arith.constant 0 : index
    %c0_3 = arith.constant 0 : index
    %c0_4 = arith.constant 0 : index
    %4 = vector.load %arg3[%c0_2, %c0_3, %c0_4] : memref<1x16x16xbf16, #tpu.memory_space<vmem>>, vector<1x16x16xbf16>
    %5 = vector.shape_cast %4 : vector<1x16x16xbf16> to vector<16x16xbf16>
    %c0_5 = arith.constant 0 : index
    %c0_6 = arith.constant 0 : index
    %c0_7 = arith.constant 0 : index
    %6 = vector.load %arg4[%c0_5, %c0_6, %c0_7] : memref<1x16x32xbf16, #tpu.memory_space<vmem>>, vector<1x16x32xbf16>
    %7 = vector.shape_cast %6 : vector<1x16x32xbf16> to vector<16x32xbf16>
    %cst = arith.constant dense<0.000000e+00> : vector<16x32xf32>
    %8 = tpu.matmul %5, %7, %cst {dimension_numbers = #tpu.dot_dimension_numbers<[1], [0], [0], [1], [0, 0, 1, 1], [], []>} : vector<16x16xbf16>, vector<16x32xbf16>, vector<16x32xf32> -> vector<16x32xf32>
    %9 = arith.addf %3, %8 : vector<16x32xf32>
    %c0_8 = arith.constant 0 : index
    %c0_9 = arith.constant 0 : index
    %10 = vector.load %arg8[%c0_8, %c0_9] : memref<16x32xf32, #tpu.memory_space<vmem>>, vector<16x32xf32>
    tpu.vector_store %arg8[%c0_8, %c0_9], %9 {strides = array<i32>} : memref<16x32xf32, #tpu.memory_space<vmem>>, vector<16x32xf32>,
    %c0_i32_10 = arith.constant 0 : i32
    %11 = arith.cmpi eq, %arg2, %c0_i32_10 : i32
    %12 = arith.extui %11 : i1 to i32
    %c0_i32_11 = arith.constant 0 : i32
    %13 = arith.cmpi ne, %12, %c0_i32_11 : i32
    scf.if %13 {
      %c0_12 = arith.constant 0 : index
      %c0_13 = arith.constant 0 : index
      %14 = vector.load %arg8[%c0_12, %c0_13] : memref<16x32xf32, #tpu.memory_space<vmem>>, vector<16x32xf32>
      %15 = arith.truncf %14 : vector<16x32xf32> to vector<16x32xbf16>
      %c0_14 = arith.constant 0 : index
      %c0_15 = arith.constant 0 : index
      %16 = vector.load %arg5[%c0_14, %c0_15] : memref<32x64xbf16, #tpu.memory_space<vmem>>, vector<32x64xbf16>
      %cst_16 = arith.constant dense<0.000000e+00> : vector<16x64xf32>
      %17 = tpu.matmul %15, %16, %cst_16 {dimension_numbers = #tpu.dot_dimension_numbers<[1], [0], [0], [1], [0, 0, 1, 1], [], []>} : vector<16x32xbf16>, vector<32x64xbf16>, vector<16x64xf32> -> vector<16x64xf32>
      %c0_17 = arith.constant 0 : index
      %c0_18 = arith.constant 0 : index
      %18 = vector.load %arg6[%c0_17, %c0_18] : memref<1x64xf32, #tpu.memory_space<vmem>>, vector<1x64xf32>
      %19 = vector.broadcast %18 : vector<1x64xf32> to vector<16x64xf32>
      %20 = arith.addf %17, %19 : vector<16x64xf32>
      %cst_19 = arith.constant 0.000000e+00 : f32
      %21 = vector.broadcast %cst_19 : f32 to vector<16x64xf32>
      %22 = arith.maximumf %20, %21 : vector<16x64xf32>
      %23 = arith.mulf %22, %22 : vector<16x64xf32>
      %cst_20 = arith.constant dense<0.000000e+00> : vector<16xf32>
      %24 = vector.multi_reduction <add>, %23, %cst_20 [1] : vector<16x64xf32> to vector<16xf32>
      %25 = vector.shape_cast %24 : vector<16xf32> to vector<16x1xf32>
      %cst_21 = arith.constant 9.99999996E-13 : f32
      %26 = vector.broadcast %cst_21 : f32 to vector<16x1xf32>
      %27 = arith.addf %25, %26 : vector<16x1xf32>
      %28 = math.rsqrt %27 : vector<16x1xf32>
      %29 = vector.broadcast %28 : vector<16x1xf32> to vector<16x64xf32>
      %30 = arith.mulf %22, %29 : vector<16x64xf32>
      %31 = arith.truncf %30 : vector<16x64xf32> to vector<16x64xbf16>
      %c0_22 = arith.constant 0 : index
      %c0_23 = arith.constant 0 : index
      %c0_24 = arith.constant 0 : index
      %32 = vector.load %arg7[%c0_22, %c0_23, %c0_24] : memref<1x16x64xbf16, #tpu.memory_space<vmem>>, vector<1x16x64xbf16>
      %33 = vector.shape_cast %32 : vector<1x16x64xbf16> to vector<16x64xbf16>
      %34 = vector.shape_cast %31 : vector<16x64xbf16> to vector<1x16x64xbf16>
      tpu.vector_store %arg7[%c0_22, %c0_23, %c0_24], %34 {strides = array<i32>} : memref<1x16x64xbf16, #tpu.memory_space<vmem>>, vector<1x16x64xbf16>,
    } else {
    }
    return
  }
  func.func @transform_0(%arg0: i32, %arg1: i32, %arg2: i32) -> (i32, i32, i32) {
    %c0_i32 = arith.constant 0 : i32
    return %arg0, %arg1, %arg2 : i32, i32, i32
  }
  func.func @transform_1(%arg0: i32, %arg1: i32, %arg2: i32) -> (i32, i32, i32) {
    %c0_i32 = arith.constant 0 : i32
    %c0_i32_0 = arith.constant 0 : i32
    return %arg0, %arg2, %c0_i32 : i32, i32, i32
  }
  func.func @transform_2(%arg0: i32, %arg1: i32, %arg2: i32) -> (i32, i32) {
    %c0_i32 = arith.constant 0 : i32
    %c0_i32_0 = arith.constant 0 : i32
    %c0_i32_1 = arith.constant 0 : i32
    return %c0_i32, %c0_i32_0 : i32, i32
  }
  func.func @transform_3(%arg0: i32, %arg1: i32, %arg2: i32) -> (i32, i32) {
    %c0_i32 = arith.constant 0 : i32
    %c0_i32_0 = arith.constant 0 : i32
    %c0_i32_1 = arith.constant 0 : i32
    return %c0_i32, %c0_i32_0 : i32, i32
  }
  func.func @transform_4(%arg0: i32, %arg1: i32, %arg2: i32) -> (i32, i32, i32) {
    %c0_i32 = arith.constant 0 : i32
    %c0_i32_0 = arith.constant 0 : i32
    return %arg0, %arg1, %c0_i32 : i32, i32, i32
  }
}

</mosaic_0001>

<llo_original>
// kernel: tpu_custom_call.1
$region0: #{tpu_custom_call.1}
  #allocation0 [shape = 'u32[]', space=smem, size = 0x4, offset = 0x4, fixed_abs, tag = 'smem constant byte address 0x4 - core index']
  #allocation1 [shape = 'u32[144,128]{1,0:T(1,128)}', space=vmem, size = 0x12000, scoped, tag = 'internal scratch']
  #allocation2 [shape = 'f32[16,32]{1,0:T(8,128)}', space=vmem, size = 0x2000, scoped, tag = 'scratch operand']
  %s0 = inlined_call_operand.hbm [shape: bf16[2,16,16], index: 0, kind: input, shape index: {}]
  %s1 = inlined_call_operand.hbm [shape: bf16[2,16,32], index: 1, kind: input, shape index: {}]
  %s2 = inlined_call_operand.hbm [shape: bf16[32,64], index: 2, kind: input, shape index: {}]
  %s3 = inlined_call_operand.vmem [shape: f32[1,64], index: 3, kind: input, shape index: {}]
  %s4 = inlined_call_operand.hbm [shape: bf16[2,16,64], index: 4, kind: output, shape index: {}]
  %s5 = sld [smem:[#allocation0]]
  $region69: #{tpu_custom_call.1} parent=0
    _
  %s7 = ssub.s32 1, %s5
  %s8 = scalar_select 0, %s7, %s5
  $region1: #{tpu_custom_call.1} parent=0
    #allocation3 [shape = 'u8[8192]{0}', space=vmem, size = 0x2000, scoped, tag = 'input window, operand 0']
    #allocation4 [shape = 's32[2]{0}', space=sflag, size = 0x8, scoped, tag = 'scoped memory for tpu_custom_call.1']
    #allocation5 [shape = 's32[2]{0}', space=sflag, size = 0x8, scoped, tag = 'scoped memory for tpu_custom_call.1']
    #allocation6 [shape = 'u8[8192]{0}', space=vmem, size = 0x2000, scoped, tag = 'input window, operand 1']
    #allocation7 [shape = 's32[2]{0}', space=sflag, size = 0x8, scoped, tag = 'scoped memory for tpu_custom_call.1']
    #allocation8 [shape = 'u8[8192]{0}', space=vmem, size = 0x2000, scoped, tag = 'input window, operand 2, single buffered']
    #allocation9 [shape = 'u8[8192]{0}', space=vmem, size = 0x2000, scoped, tag = 'output window, operand 0']
    %9 = vsyncpa [#allocation4], 0
    %s10 = scalar_lea.sflag [#allocation4], 1
    %11 = vsyncpa %s10, 0
    %12 = vsyncpa [#allocation7], 0
    %s13 = scalar_lea.sflag [#allocation7], 1
    %14 = vsyncpa %s13, 0
    %15 = vsyncpa [#allocation5], 0
    %s16 = scalar_lea.sflag [#allocation5], 1
    %17 = vsyncpa %s16, 0
    loop: start=0, step=1, limit=4
    $region2: #{tpu_custom_call.1} parent=1 // loop_pre_header
      _
    $region3: #{tpu_custom_call.1} parent=1 // loop_header
      %s19 = sphi 0, %s23
      %p20 = scmp.ge.s32.totalorder %s19, 4
      %s26 = sphi 0, %s45
      %s27 = sphi 0, %s41
      %s28 = sphi 0, %s37
      %s29 = sphi 0, %s26
      %s30 = sphi 0, %s27
      %s31 = sphi 0, %s28
      %s32 = sphi 0, %s29
      %s33 = sphi 0, %s30
      %s34 = sphi 0, %s31
      %s52 = sphi 0, %s54
      %s55 = sphi 0, %s52
      %s56 = sphi 0, %s55
      %s72 = sphi 0, %s56
      %s80 = sphi 0, %s82
      %s83 = sphi 0, %s80
      %s84 = sphi 0, %s83
      %s100 = sphi 0, %s84
      %s104 = sphi 0, %s104
      %s106 = sphi 0, %s104
      %s107 = sphi 0, %s106
      %s121 = sphi 0, %s107
      %s125 = sphi 0, %s125
      %s127 = sphi 0, %s125
      %s128 = sphi 0, %s127
      %s142 = sphi 0, %s128
      %s150 = sphi 0, %s152
      %s153 = sphi 0, %s150
      %s154 = sphi 0, %s153
      %s170 = sphi 0, %s154
    $region4: #{tpu_custom_call.1} parent=1 // loop_header_branch
      %22 = sbr.rel (%p20) target = $region8
    $region5: #{tpu_custom_call.1} parent=1 // loop_body
      %s24 = ssub.s32 %s19, 1
      %s25 = ssub.s32 %s19, 2
      %s35 = sadd.s32 1, %s28
      %p36 = scmp.ge.s32.totalorder %s35, 1
      %s37 = scalar_select %p36, 0, %s35
      %s38 = sadd.s32 1, %s27
      %s39 = scalar_select %p36, %s38, %s27
      %p40 = scmp.ge.s32.totalorder %s39, 1
      %s41 = scalar_select %p40, 0, %s39
      %s42 = sadd.s32 1, %s26
      %s43 = scalar_select %p40, %s42, %s26
      %p44 = scmp.ge.s32.totalorder %s43, 2
      %s45 = scalar_select %p44, 0, %s43
      %s46 = ssub.s32 %s26, %s45
      %s47 = ssub.s32 %s27, %s41
      %s48 = sor.u32 %s46, %s47
      %s49 = ssub.s32 %s28, %s37
      %s50 = sor.u32 %s48, %s49
      %p51 = scmp.eq.s32.totalorder %s50, 0
      %s53 = sadd.s32 %s52, 1
      %s54 = scalar_select %p51, %s52, %s53
      %p57 = pneg %p51
      %p58 = scmp.eq.s32.totalorder %s19, 1
      %p59 = por %p57, %p58
      %p60 = scmp.ne.s32.totalorder %s52, %s55
      %p61 = scmp.eq.s32.totalorder %s19, 0
      %p62 = por %p60, %p61
      %p63 = scmp.ne.s32.totalorder %s52, %s55
      %p64 = scmp.eq.s32.totalorder %s24, 1
      %p65 = por %p63, %p64
      %p66 = scmp.ne.s32.totalorder %s55, %s56
      %p67 = scmp.eq.s32.totalorder %s24, 0
      %p68 = por %p66, %p67
      %p69 = scmp.ne.s32.totalorder %s55, %s56
      %p70 = scmp.eq.s32.totalorder %s25, 1
      %p71 = por %p69, %p70
      %p73 = scmp.ne.s32.totalorder %s56, %s72
      %p74 = scmp.eq.s32.totalorder %s25, 0
      %p75 = por %p73, %p74
      %s76 = ssub.s32 %s26, %s45
      %s77 = ssub.s32 %s28, %s37
      %s78 = sor.u32 %s76, %s77
      %p79 = scmp.eq.s32.totalorder %s78, 0
      %s81 = sadd.s32 %s80, 1
      %s82 = scalar_select %p79, %s80, %s81
      %p85 = pneg %p79
      %p86 = scmp.eq.s32.totalorder %s19, 1
      %p87 = por %p85, %p86
      %p88 = scmp.ne.s32.totalorder %s80, %s83
      %p89 = scmp.eq.s32.totalorder %s19, 0
      %p90 = por %p88, %p89
      %p91 = scmp.ne.s32.totalorder %s80, %s83
      %p92 = scmp.eq.s32.totalorder %s24, 1
      %p93 = por %p91, %p92
      %p94 = scmp.ne.s32.totalorder %s83, %s84
      %p95 = scmp.eq.s32.totalorder %s24, 0
      %p96 = por %p94, %p95
      %p97 = scmp.ne.s32.totalorder %s83, %s84
      %p98 = scmp.eq.s32.totalorder %s25, 1
      %p99 = por %p97, %p98
      %p101 = scmp.ne.s32.totalorder %s84, %s100
      %p102 = scmp.eq.s32.totalorder %s25, 0
      %p103 = por %p101, %p102
      %s105 = sadd.s32 %s104, 1
      %p108 = scmp.eq.s32.totalorder %s19, 1
      %p109 = scmp.ne.s32.totalorder %s104, %s106
      %p110 = scmp.eq.s32.totalorder %s19, 0
      %p111 = por %p109, %p110
      %p112 = scmp.ne.s32.totalorder %s104, %s106
      %p113 = scmp.eq.s32.totalorder %s24, 1
      %p114 = por %p112, %p113
      %p115 = scmp.ne.s32.totalorder %s106, %s107
      %p116 = scmp.eq.s32.totalorder %s24, 0
      %p117 = por %p115, %p116
      %p118 = scmp.ne.s32.totalorder %s106, %s107
      %p119 = scmp.eq.s32.totalorder %s25, 1
      %p120 = por %p118, %p119
      %p122 = scmp.ne.s32.totalorder %s107, %s121
      %p123 = scmp.eq.s32.totalorder %s25, 0
      %p124 = por %p122, %p123
      %s126 = sadd.s32 %s125, 1
      %p129 = scmp.eq.s32.totalorder %s19, 1
      %p130 = scmp.ne.s32.totalorder %s125, %s127
      %p131 = scmp.eq.s32.totalorder %s19, 0
      %p132 = por %p130, %p131
      %p133 = scmp.ne.s32.totalorder %s125, %s127
      %p134 = scmp.eq.s32.totalorder %s24, 1
      %p135 = por %p133, %p134
      %p136 = scmp.ne.s32.totalorder %s127, %s128
      %p137 = scmp.eq.s32.totalorder %s24, 0
      %p138 = por %p136, %p137
      %p139 = scmp.ne.s32.totalorder %s127, %s128
      %p140 = scmp.eq.s32.totalorder %s25, 1
      %p141 = por %p139, %p140
      %p143 = scmp.ne.s32.totalorder %s128, %s142
      %p144 = scmp.eq.s32.totalorder %s25, 0
      %p145 = por %p143, %p144
      %s146 = ssub.s32 %s26, %s45
      %s147 = ssub.s32 %s27, %s41
      %s148 = sor.u32 %s146, %s147
      %p149 = scmp.eq.s32.totalorder %s148, 0
      %s151 = sadd.s32 %s150, 1
      %s152 = scalar_select %p149, %s150, %s151
      %p155 = pneg %p149
      %p156 = scmp.eq.s32.totalorder %s19, 1
      %p157 = por %p155, %p156
      %p158 = scmp.ne.s32.totalorder %s150, %s153
      %p159 = scmp.eq.s32.totalorder %s19, 0
      %p160 = por %p158, %p159
      %p161 = scmp.ne.s32.totalorder %s150, %s153
      %p162 = scmp.eq.s32.totalorder %s24, 1
      %p163 = por %p161, %p162
      %p164 = scmp.ne.s32.totalorder %s153, %s154
      %p165 = scmp.eq.s32.totalorder %s24, 0
      %p166 = por %p164, %p165
      %p167 = scmp.ne.s32.totalorder %s153, %s154
      %p168 = scmp.eq.s32.totalorder %s25, 1
      %p169 = por %p167, %p168
      %p171 = scmp.ne.s32.totalorder %s154, %s170
      %p172 = scmp.eq.s32.totalorder %s25, 0
      %p173 = por %p171, %p172
      %p174 = scmp.le.s32.totalorder 1, %s19
      %p175 = scmp.lt.s32.totalorder %s19, 3
      %p176 = pnand %p174, %p175
      %p177 = pneg %p176
      // Predicated region
      $region9: #{tpu_custom_call.1} parent=5 // pred_check
        _
      $region10: #{tpu_custom_call.1} parent=5 // pred_check_branch
        %179 = sbr.rel (%p176) target = $region12
      $region11: #{tpu_custom_call.1} parent=5 // pred_region
        %s180 = ssub.s32 %s19, 1
        // Predicated region
        $region13: #{tpu_custom_call.1} parent=11 // pred_check
          %p181 = pneg %p117
        $region14: #{tpu_custom_call.1} parent=11 // pred_check_branch
          %183 = sbr.rel (%p181) target = $region16
        $region15: #{tpu_custom_call.1} parent=11 // pred_region
          %s185 = ssub.s32 256, 256
          %186 = vsyncadd [#allocation7], %s185
          %s187 = sshll.u32 [#allocation8], 4
          %s188 = int_to_ptr.vmem [resolvable:$true] %s187
          %193 = dma.hbm_to_vmem [thread:$0]  %s2, 256, %s188, [#allocation7], 64, 64, 4
        $region16: #{tpu_custom_call.1} parent=11 // pred_fallthru
          _
        // Predicated region
        $region17: #{tpu_custom_call.1} parent=11 // pred_check
          %p194 = pneg %p138
        $region18: #{tpu_custom_call.1} parent=11 // pred_check_branch
          %196 = sbr.rel (%p194) target = $region20
        $region19: #{tpu_custom_call.1} parent=11 // pred_region
          _
        $region20: #{tpu_custom_call.1} parent=11 // pred_fallthru
          _
      $region12: #{tpu_custom_call.1} parent=5 // pred_fallthru
        _
      %p197 = scmp.lt.s32.totalorder %s19, 2
      // Predicated region
      $region21: #{tpu_custom_call.1} parent=5 // pred_check
        %p198 = pneg %p197
      $region22: #{tpu_custom_call.1} parent=5 // pred_check_branch
        %200 = sbr.rel (%p198) target = $region24
      $region23: #{tpu_custom_call.1} parent=5 // pred_region
        // Predicated region
        $region25: #{tpu_custom_call.1} parent=23 // pred_check
          %p201 = pneg %p62
        $region26: #{tpu_custom_call.1} parent=23 // pred_check_branch
          %203 = sbr.rel (%p201) target = $region28
        $region27: #{tpu_custom_call.1} parent=23 // pred_region
          %s204 = sand.u32 %s52, 1
          %s205 = scalar_lea.sflag [#allocation4], %s204
          %s206 = sand.u32 %s52, 1
          %s207 = smul.addr %s206, 8
          %s208 = scalar_lea.vmem [#allocation3], %s207
          %s209 = smul.u32 2, %s27
          %s211 = ssub.s32 128, 128
          %212 = vsyncadd %s205, %s211
          %s213 = sadd.s32 %s28, %s209
          %s214 = smul.addr %s26, 2
          %s215 = sadd.s32 %s213, %s214
          %s216 = smul.addr %s215, 64
          %s217 = scalar_lea.hbm %s0, %s216
          %s218 = sshll.u32 %s208, 4
          %s219 = int_to_ptr.vmem [resolvable:$true] %s218
          %224 = dma.hbm_to_vmem [thread:$0]  %s217, 128, %s219, %s205, 64, 64, 4
        $region28: #{tpu_custom_call.1} parent=23 // pred_fallthru
          _
        // Predicated region
        $region29: #{tpu_custom_call.1} parent=23 // pred_check
          %p225 = pneg %p90
        $region30: #{tpu_custom_call.1} parent=23 // pred_check_branch
          %227 = sbr.rel (%p225) target = $region32
        $region31: #{tpu_custom_call.1} parent=23 // pred_region
          %s228 = sand.u32 %s19, 1
          %s229 = scalar_lea.sflag [#allocation7], %s228
          %s230 = sand.u32 %s80, 1
          %s231 = smul.addr %s230, 8
          %s232 = scalar_lea.vmem [#allocation6], %s231
          %s233 = smul.u32 2, %s28
          %s235 = ssub.s32 128, 128
          %236 = vsyncadd %s229, %s235
          %s237 = smul.addr %s26, 2
          %s238 = sadd.s32 %s233, %s237
          %s239 = smul.addr %s238, 64
          %s240 = scalar_lea.hbm %s1, %s239
          %s241 = sshll.u32 %s232, 4
          %s242 = int_to_ptr.vmem [resolvable:$true] %s241
          %247 = dma.hbm_to_vmem [thread:$0]  %s240, 128, %s242, %s229, 64, 64, 4
        $region32: #{tpu_custom_call.1} parent=23 // pred_fallthru
          _
      $region24: #{tpu_custom_call.1} parent=5 // pred_fallthru
        _
      %p248 = scmp.le.s32.totalorder 1, %s19
      %p249 = scmp.lt.s32.totalorder %s19, 3
      %p250 = pnand %p248, %p249
      %p251 = pneg %p250
      // Predicated region
      $region33: #{tpu_custom_call.1} parent=5 // pred_check
        _
      $region34: #{tpu_custom_call.1} parent=5 // pred_check_branch
        %253 = sbr.rel (%p250) target = $region36
      $region35: #{tpu_custom_call.1} parent=5 // pred_region
        %s254 = ssub.s32 %s19, 1
        %s255 = sand.u32 %s55, 1
        %s256 = scalar_lea.sflag [#allocation4], %s255
        %s257 = sand.u32 %s55, 1
        %s258 = smul.addr %s257, 8
        %s259 = scalar_lea.vmem [#allocation3], %s258
        // Predicated region
        $region37: #{tpu_custom_call.1} parent=35 // pred_check
          %p260 = pneg %p68
        $region38: #{tpu_custom_call.1} parent=35 // pred_check_branch
          %262 = sbr.rel (%p260) target = $region40
        $region39: #{tpu_custom_call.1} parent=35 // pred_region
          %263 = dma.done %s256, 128
        $region40: #{tpu_custom_call.1} parent=35 // pred_fallthru
          _
        %s264 = sand.u32 %s24, 1
        %s265 = scalar_lea.sflag [#allocation7], %s264
        %s266 = sand.u32 %s83, 1
        %s267 = smul.addr %s266, 8
        %s268 = scalar_lea.vmem [#allocation6], %s267
        // Predicated region
        $region41: #{tpu_custom_call.1} parent=35 // pred_check
          %p269 = pneg %p96
        $region42: #{tpu_custom_call.1} parent=35 // pred_check_branch
          %271 = sbr.rel (%p269) target = $region44
        $region43: #{tpu_custom_call.1} parent=35 // pred_region
          %272 = dma.done %s265, 128
        $region44: #{tpu_custom_call.1} parent=35 // pred_fallthru
          _
        // Predicated region
        $region45: #{tpu_custom_call.1} parent=35 // pred_check
          %p273 = pneg %p117
        $region46: #{tpu_custom_call.1} parent=35 // pred_check_branch
          %275 = sbr.rel (%p273) target = $region48
        $region47: #{tpu_custom_call.1} parent=35 // pred_region
          %276 = dma.done [#allocation7], 256
        $region48: #{tpu_custom_call.1} parent=35 // pred_fallthru
          _
        %s277 = sand.u32 %s55, 1
        %s278 = scalar_lea.sflag [#allocation4], %s277
        %s279 = sand.u32 %s55, 1
        %s280 = smul.addr %s279, 8
        %s281 = scalar_lea.vmem [#allocation3], %s280
        %p282 = pneg %p68
        %p283 = pneg %p65
        %s284 = sand.u32 %s24, 1
        %s285 = scalar_lea.sflag [#allocation7], %s284
        %s286 = sand.u32 %s83, 1
        %s287 = smul.addr %s286, 8
        %s288 = scalar_lea.vmem [#allocation6], %s287
        %p289 = pneg %p96
        %p290 = pneg %p93
        %p291 = pneg %p117
        %p292 = pneg %p114
        %p293 = pneg %p138
        %p294 = pneg %p135
        %p295 = pneg %p166
        %p296 = pneg %p163
        %s297 = sand.u32 %s153, 1
        %s298 = scalar_lea.sflag [#allocation5], %s297
        %s299 = sand.u32 %s153, 1
        %s300 = smul.addr %s299, 8
        %s301 = scalar_lea.vmem [#allocation9], %s300
        %s302 = smul.u32 2, %s30
        %s303 = smul.u32 2, %s31
        %s304 = smul.u32 2, %s30
        %p306 = scmp.eq.s32.totalorder %s31, 0
        // Predicated region
        $region49: #{tpu_custom_call.1} parent=35 // pred_check
          %p307 = pneg %p306
        $region50: #{tpu_custom_call.1} parent=35 // pred_check_branch
          %309 = sbr.rel (%p307) target = $region52
        $region51: #{tpu_custom_call.1} parent=35 // pred_region
          %vm310 = vcmask 261120
          %311 = vst.msk [vmem:[#allocation2] sm:$0xff] %vm310, 0.0
          %312 = vst.msk [vmem:[#allocation2 + $0x8] sm:$0xff] %vm310, 0.0
        $region52: #{tpu_custom_call.1} parent=35 // pred_fallthru
          _
        %v313 = vld [vmem:[#allocation2] sm:$0xff]
        %v314 = vld [vmem:[#allocation2 + $0x8] sm:$0xff]
        %v315 = vld [vmem:[%s259] sm:$0xf]
        %v316 = vld [vmem:[%s259 + $0x4] sm:$0xf]
        %v317 = vld [vmem:[%s268] sm:$0xf]
        %v318 = vld [vmem:[%s268 + $0x4] sm:$0xf]
        %v321 = vunpack.c.l.b16 %v315
        %v322 = vunpack.c.l.b16 %v316
        %v323 = vpack.c.b16 %v322, %v321
        %v326 = vunpack.c.l.b16 %v317
        %v327 = vunpack.c.l.b16 %v318
        %v328 = vpack.c.b16 %v327, %v326
        %vm330 = vcmask 130048
        %v332 = vsel %vm330, %v323, 0
        %334 = vmatprep.subr.bf16.mxu0 0
        %335 = vmatpush1.bf16.msra.mxu0 %v328
        %336 = vmatprep.subr.bf16.mxu0 0
        %337 = vmatpush1.bf16.msra.mxu0 0
        %338 = vmatprep.subr.bf16.mxu0 0
        %339 = vmatpush1.bf16.msra.mxu0 0
        %340 = vmatprep.subr.bf16.mxu0 0
        %341 = vmatpush1.bf16.msra.mxu0 0
        %342 = vmatprep.subr.bf16.mxu0 0
        %343 = vmatpush1.bf16.msra.mxu0 0
        %344 = vmatprep.subr.bf16.mxu0 0
        %345 = vmatpush1.bf16.msra.mxu0 0
        %346 = vmatprep.subr.bf16.mxu0 0
        %347 = vmatpush1.bf16.msra.mxu0 0
        %348 = vmatprep.subr.bf16.mxu0 0
        %349 = vmatpush1.bf16.msra.mxu0 0
        %350 = vmatprep.subr.bf16.mxu0 0
        %351 = vmatpush1.bf16.msra.mxu0 0
        %352 = vmatprep.subr.bf16.mxu0 0
        %353 = vmatpush1.bf16.msra.mxu0 0
        %354 = vmatprep.subr.bf16.mxu0 0
        %355 = vmatpush1.bf16.msra.mxu0 0
        %356 = vmatprep.subr.bf16.mxu0 0
        %357 = vmatpush1.bf16.msra.mxu0 0
        %358 = vmatprep.subr.bf16.mxu0 0
        %359 = vmatpush1.bf16.msra.mxu0 0
        %360 = vmatprep.subr.bf16.mxu0 0
        %361 = vmatpush1.bf16.msra.mxu0 0
        %362 = vmatprep.subr.bf16.mxu0 0
        %363 = vmatpush1.bf16.msra.mxu0 0
        %364 = vmatprep.subr.bf16.mxu0 0
        %365 = vmatpush1.bf16.msra.mxu0 0
        %366 = vmatprep.mubr.bf16.mxu0 0
        %367 = vmatmul.mubr.bf16.gmra.mrb[0].mxu0 %v332
        %v368 = vpop.f32.mrb[0].mxu0
        %v369 = vadd.f32 0.0, %v368
        %v370 = vpop.f32.mrb[0].mxu0
        %v371 = vpop.f32.mrb[0].mxu0
        %v372 = vadd.f32 0.0, %v371
        %v373 = vpop.f32.mrb[0].mxu0
        %374 = vdwg.mxu0
        %v375 = vadd.f32 %v313, %v369
        %v376 = vadd.f32 %v314, %v372
        %vm377 = vcmask 261120
        %378 = vst.msk [vmem:[#allocation2] sm:$0xff] %vm377, %v375
        %379 = vst.msk [vmem:[#allocation2 + $0x8] sm:$0xff] %vm377, %v376
        // Predicated region
        $region53: #{tpu_custom_call.1} parent=35 // pred_check
          %p380 = pneg %p306
        $region54: #{tpu_custom_call.1} parent=35 // pred_check_branch
          %382 = sbr.rel (%p380) target = $region56
        $region55: #{tpu_custom_call.1} parent=35 // pred_region
          %v383 = vld [vmem:[#allocation2] sm:$0xff]
          %v384 = vld [vmem:[#allocation2 + $0x8] sm:$0xff]
          %v385 = vpack.c.bf16 %v384, %v383
          %v386 = vld [vmem:[#allocation8] sm:$0xf]
          %v387 = vld [vmem:[#allocation8 + $0x4] sm:$0xf]
          %v388 = vld [vmem:[#allocation8 + $0x8] sm:$0xf]
          %v389 = vld [vmem:[#allocation8 + $0xc] sm:$0xf]
          %v390 = vld [vmem:[%s3] sm:$0x1]
          %v392 = vlaneseq
          %v393 = vshrl.u32 %v392, 7
          %v394 = vsub.s32 0, %v393
          %v395 = vrot.slane %v390, %v394
          %v401 = vunpack.c.l.b16 %v386
          %v402 = vunpack.c.l.b16 %v387
          %v403 = vunpack.c.l.b16 %v388
          %v404 = vunpack.c.l.b16 %v389
          %v405 = vpack.c.b16 %v402, %v401
          %v406 = vpack.c.b16 %v404, %v403
          %v410 = vsel %vm377, %v385, 0
          %412 = vmatprep.subr.bf16.mxu0 0
          %413 = vmatpush1.bf16.msra.mxu0 %v405
          %414 = vmatprep.subr.bf16.mxu0 0
          %415 = vmatpush1.bf16.msra.mxu0 %v406
          %416 = vmatprep.subr.bf16.mxu0 0
          %417 = vmatpush1.bf16.msra.mxu0 0
          %418 = vmatprep.subr.bf16.mxu0 0
          %419 = vmatpush1.bf16.msra.mxu0 0
          %420 = vmatprep.subr.bf16.mxu0 0
          %421 = vmatpush1.bf16.msra.mxu0 0
          %422 = vmatprep.subr.bf16.mxu0 0
          %423 = vmatpush1.bf16.msra.mxu0 0
          %424 = vmatprep.subr.bf16.mxu0 0
          %425 = vmatpush1.bf16.msra.mxu0 0
          %426 = vmatprep.subr.bf16.mxu0 0
          %427 = vmatpush1.bf16.msra.mxu0 0
          %428 = vmatprep.subr.bf16.mxu0 0
          %429 = vmatpush1.bf16.msra.mxu0 0
          %430 = vmatprep.subr.bf16.mxu0 0
          %431 = vmatpush1.bf16.msra.mxu0 0
          %432 = vmatprep.subr.bf16.mxu0 0
          %433 = vmatpush1.bf16.msra.mxu0 0
          %434 = vmatprep.subr.bf16.mxu0 0
          %435 = vmatpush1.bf16.msra.mxu0 0
          %436 = vmatprep.subr.bf16.mxu0 0
          %437 = vmatpush1.bf16.msra.mxu0 0
          %438 = vmatprep.subr.bf16.mxu0 0
          %439 = vmatpush1.bf16.msra.mxu0 0
          %440 = vmatprep.subr.bf16.mxu0 0
          %441 = vmatpush1.bf16.msra.mxu0 0
          %442 = vmatprep.subr.bf16.mxu0 0
          %443 = vmatpush1.bf16.msra.mxu0 0
          %444 = vmatprep.mubr.bf16.mxu0 0
          %445 = vmatmul.mubr.bf16.gmra.mrb[0].mxu0 %v410
          %v446 = vpop.f32.mrb[0].mxu0
          %v447 = vadd.f32 %v395, %v446
          %v448 = vpop.f32.mrb[0].mxu0
          %v449 = vpop.f32.mrb[0].mxu0
          %v450 = vadd.f32 %v395, %v449
          %v451 = vpop.f32.mrb[0].mxu0
          %452 = vdwg.mxu0
          %v453 = vmax.f32 %v447, 0.0
          %v454 = vmax.f32 %v450, 0.0
          %v455 = vmul.f32 %v453, %v453
          %v456 = vmul.f32 %v454, %v454
          %vm457 = vcmask 523264
          %v458 = vsel %vm457, %v455, 0.0
          %459 = vadd.xlane.f32.xlu0 %v458
          %v460 = vpop.xlane.xlu0 %459
          %v461 = vsel %vm457, %v456, 0.0
          %462 = vadd.xlane.f32.xlu0 %v461
          %v463 = vpop.xlane.xlu0 %462
          %v464 = vadd.f32 %v460, 1e-12
          %v465 = vadd.f32 %v463, 1e-12
          %v466 = vrsqrt.pop %v464
          %v467 = vrsqrt.pop %v465
          %v468 = vmul.f32 %v453, %v466
          %v469 = vmul.f32 %v454, %v467
          %v470 = vpack.c.bf16 %v469, %v468
          %v472 = vunpack.c.l.b16 %v470
          %v473 = vunpack.c.h.b16 %v470
          %v474 = vpack.c.b16 %v472, %v472
          %v475 = vpack.c.b16 %v473, %v473
          %vm478 = vcmask 519168
          %479 = vst.msk [vmem:[%s301] sm:$0xf] %vm478, %v474
          %480 = vst.msk [vmem:[%s301 + $0x4] sm:$0xf] %vm478, %v475
        $region56: #{tpu_custom_call.1} parent=35 // pred_fallthru
          _
        %s481 = sand.u32 %s153, 1
        %s482 = scalar_lea.sflag [#allocation5], %s481
        %s483 = sand.u32 %s153, 1
        %s484 = smul.addr %s483, 8
        %s485 = scalar_lea.vmem [#allocation9], %s484
        // Predicated region
        $region57: #{tpu_custom_call.1} parent=35 // pred_check
          %p486 = pneg %p163
        $region58: #{tpu_custom_call.1} parent=35 // pred_check_branch
          %488 = sbr.rel (%p486) target = $region60
        $region59: #{tpu_custom_call.1} parent=35 // pred_region
          %s489 = smul.u32 2, %s30
          %s491 = ssub.s32 128, 128
          %492 = vsyncadd %s482, %s491
          %s493 = smul.addr %s29, 2
          %s494 = sadd.s32 %s489, %s493
          %s495 = smul.addr %s494, 64
          %s496 = scalar_lea.hbm %s4, %s495
          %s497 = sshll.u32 %s485, 4
          %s498 = int_to_ptr.vmem [resolvable:$true] %s497
          %503 = dma.vmem_to_hbm [thread:$0]  %s498, 128, %s496, %s482, 64, 64, 4
        $region60: #{tpu_custom_call.1} parent=35 // pred_fallthru
          _
      $region36: #{tpu_custom_call.1} parent=5 // pred_fallthru
        _
      %p504 = scmp.le.s32.totalorder 2, %s19
      // Predicated region
      $region61: #{tpu_custom_call.1} parent=5 // pred_check
        %p505 = pneg %p504
      $region62: #{tpu_custom_call.1} parent=5 // pred_check_branch
        %507 = sbr.rel (%p505) target = $region64
      $region63: #{tpu_custom_call.1} parent=5 // pred_region
        %s508 = ssub.s32 %s19, 2
        // Predicated region
        $region65: #{tpu_custom_call.1} parent=63 // pred_check
          %p509 = pneg %p169
        $region66: #{tpu_custom_call.1} parent=63 // pred_check_branch
          %511 = sbr.rel (%p509) target = $region68
        $region67: #{tpu_custom_call.1} parent=63 // pred_region
          %s512 = sand.u32 %s154, 1
          %s513 = scalar_lea.sflag [#allocation5], %s512
          %s514 = sand.u32 %s154, 1
          %s515 = smul.addr %s514, 8
          %s516 = scalar_lea.vmem [#allocation9], %s515
          %517 = dma.done %s513, 128
        $region68: #{tpu_custom_call.1} parent=63 // pred_fallthru
          _
      $region64: #{tpu_custom_call.1} parent=5 // pred_fallthru
        _
    $region6: #{tpu_custom_call.1} parent=1 // loop_footer
      %s23 = sadd.s32 1, %s19
    $region7: #{tpu_custom_call.1} parent=1 // loop_footer_branch
      %18 = sbr.rel target = $region3
    $region8: #{tpu_custom_call.1} parent=1 // loop_exit
      _
    %518 = vsyncpa [#allocation4], 1
    %s519 = scalar_lea.sflag [#allocation4], 1
    %520 = vsyncpa %s519, 1
    %521 = vsyncpa [#allocation7], 1
    %s522 = scalar_lea.sflag [#allocation7], 1
    %523 = vsyncpa %s522, 1
    %524 = vsyncpa [#allocation5], 1
    %s525 = scalar_lea.sflag [#allocation5], 1
    %526 = vsyncpa %s525, 1

</llo_original>
